<compile_context>
chip_gen: v6e
topology: v6e:2x2x1
jax: 0.10.0
libtpu: 0.0.40
codegen_flags: <defaults>
</compile_context>

<pallas_src>
import functools
import itertools

import numpy as np
import jax
import jax.numpy as jnp
from jax.experimental import pallas as pl
from jax.experimental.pallas import tpu as pltpu


def _round_up(x, m):
    return ((x + m - 1) // m) * m


def _bucket_targets(t):
    """Static T buckets (bounds Mosaic recompiles as the target count drifts)."""
    t_pad = max(128, _round_up(int(t), 128))
    for b in (128, 256, 512, 1024, 2048):
        if t_pad <= b:
            return b
    return _round_up(t_pad, 2048)


# ----------------------------- Pallas kernel ------------------------------ #

def _matcher_cost_kernel(logits_ref, onehot_ref, out_cl_ref, tgt_se_ref, c_ref,
                         *, w_class, w_seg, w_giou, num_classes):
    # ---- softmax numerator / denominator over classes ---------------------- #
    logits = logits_ref[...]                                        # (TN, Cpad) f32
    c_pad = logits.shape[-1]
    if num_classes < c_pad:
        # class-dim padding handled in-kernel (wrapper only zero-pads).
        lane = jax.lax.broadcasted_iota(jnp.int32, logits.shape, 1)
        logits = jnp.where(lane < num_classes, logits, -1e30)
    m = jnp.max(logits, axis=-1, keepdims=True)
    e = jnp.exp(logits - m)                                         # padded cols -> 0
    sum_e = jnp.sum(e, axis=-1, keepdims=True)                      # (TN, 1)

    # ---- class cost: gather-by-one-hot as a bf16 MXU matmul ---------------- #
    # -w_class and the softmax normalization fold into one narrow (TN, 1)
    # operand; exact divide (narrow -> essentially free, and more accurate).
    s = jnp.dot(e.astype(jnp.bfloat16), onehot_ref[...],
                preferred_element_type=jnp.float32)                 # (TN, Ttile)
    cost = s * ((-w_class) / sum_e)

    # ---- derive (start, end) / (center, length) in-kernel ------------------ #
    ocl = out_cl_ref[...]                                           # (TN, 2)
    oc = ocl[:, 0:1]
    ol = ocl[:, 1:2]
    tse = tgt_se_ref[...]                                           # (2, Ttile)
    ts = tse[0:1, :]
    te = tse[1:2, :]
    tc = 0.5 * (ts + te)
    tl = te - ts

    # ---- L1 cdist between pred (c,l) and target (c,l) ---------------------- #
    # w_seg pre-folded into the narrow operands -> no full-tile weight multiply.
    if w_seg >= 0:
        cost += (jnp.abs(w_seg * oc - w_seg * tc)
                 + jnp.abs(w_seg * ol - w_seg * tl))
    else:  # keep exact semantics for (unusual) negative weights
        cost += w_seg * (jnp.abs(oc - tc) + jnp.abs(ol - tl))

    # ---- temporal IoU between pred (s,e) and target (s,e) ------------------ #
    half_ol = 0.5 * ol
    os_ = oc - half_ol                                              # (TN, 1)
    oe = oc + half_ol
    left = jnp.maximum(os_, ts)
    right = jnp.minimum(oe, te)
    inter = jnp.maximum(right - left, 0.0)
    union = (ol + (tl + 1e-6)) - inter                              # eps: NaN guard
    cost -= inter * (w_giou * pl.reciprocal(union, approx=True))

    c_ref[...] = cost.astype(c_ref.dtype)


# ------------------------- jitted cost-matrix core ------------------------- #

@functools.partial(jax.jit,
                   static_argnames=("w_class", "w_seg", "w_giou", "out_dtype"))
def _cost_matrix_core(pred_logits, pred_segments, tgt_ids_p, tgt_seg_p,
                      *, w_class, w_seg, w_giou, out_dtype):
    bs, nq, num_classes = pred_logits.shape
    n = bs * nq
    t_pad = int(tgt_ids_p.shape[0])                 # already bucketed by caller

    # ---- static, lane-dense padded sizes ----------------------------------- #
    c_pad = max(128, _round_up(num_classes, 128))   # keep 128; don't "fill" the MXU
    tn = min(256, _round_up(max((n + 1) // 2, 1), 8))   # >=2 row tiles (v7x), cap 256
    n_pad = _round_up(n, tn)
    t_tile = min(t_pad, 2048)                       # bound the per-step output block

    # ---- padded operands (all of this fuses under jit) ---------------------- #
    logits = pred_logits.reshape(n, num_classes).astype(jnp.float32)
    logits_p = jnp.pad(logits, ((0, n_pad - n), (0, c_pad - num_classes)))
    out_cl_p = jnp.pad(pred_segments.reshape(n, 2).astype(jnp.float32),
                       ((0, n_pad - n), (0, 0)))

    # One-hot built directly in (Cpad, Tpad) orientation: single compare+select.
    # Padded target columns carry an out-of-range id -> all-zero columns.
    class_iota = jax.lax.broadcasted_iota(jnp.int32, (c_pad, t_pad), 0)
    onehot_p = (class_iota == tgt_ids_p[None, :].astype(jnp.int32)
                ).astype(jnp.bfloat16)

    tgt_se_p = jnp.transpose(tgt_seg_p.astype(jnp.float32))         # (2, Tpad)

    kernel = functools.partial(_matcher_cost_kernel,
                               w_class=float(w_class), w_seg=float(w_seg),
                               w_giou=float(w_giou), num_classes=int(num_classes))

    grid = (n_pad // tn, t_pad // t_tile)
    c = pl.pallas_call(
        kernel,
        out_shape=jax.ShapeDtypeStruct((n_pad, t_pad), out_dtype),
        grid=grid,
        in_specs=[
            pl.BlockSpec((tn, c_pad), lambda i, j: (i, 0)),      # per-row logits
            pl.BlockSpec((c_pad, t_tile), lambda i, j: (0, j)),  # shared one-hot
            pl.BlockSpec((tn, 2), lambda i, j: (i, 0)),          # per-row (c, l)
            pl.BlockSpec((2, t_tile), lambda i, j: (0, j)),      # shared tgt (s, e)^T
        ],
        out_specs=pl.BlockSpec((tn, t_tile), lambda i, j: (i, j)),
        compiler_params=pltpu.CompilerParams(
            dimension_semantics=("parallel", "parallel"),
            vmem_limit_bytes=32 * 1024 * 1024),
    )(logits_p, onehot_p, out_cl_p, tgt_se_p)

    # Row padding sliced off here (static); column slice happens outside.
    return c[:n].reshape(bs, nq, t_pad)


def compute_cost_matrix(pred_logits, pred_segments, tgt_ids, tgt_segments,
                        cost_class, cost_seg, cost_giou,
                        out_dtype=jnp.float32):
    """Returns C of shape (bs, num_queries, total_targets)."""
    num_classes = int(pred_logits.shape[-1])
    c_pad = max(128, _round_up(num_classes, 128))
    t = int(tgt_ids.shape[0])
    t_pad = _bucket_targets(t)

    # Pad targets to the static bucket OUTSIDE jit so the jitted graph (and the
    # Mosaic kernel) are keyed only on bucketed shapes, not the raw target count.
    tgt_ids_p = jnp.pad(tgt_ids.astype(jnp.int32), (0, t_pad - t),
                        constant_values=c_pad)                   # out-of-range id
    tgt_seg_p = jnp.pad(tgt_segments.astype(jnp.float32),
                        ((0, t_pad - t), (0, 0)))

    c = _cost_matrix_core(pred_logits, pred_segments, tgt_ids_p, tgt_seg_p,
                          w_class=float(cost_class), w_seg=float(cost_seg),
                          w_giou=float(cost_giou), out_dtype=out_dtype)
    return c[:, :, :t]


# ----------------------- host-side assignment (glue) ----------------------- #

def _linear_sum_assignment(cost):
    """Hungarian assignment on a small rectangular cost matrix (host-side)."""
    # TODO(synk): linear_sum_assignment is an inherently sequential combinatorial
    # solver; it stays on the host (scipy if present, brute force fallback).
    try:
        from scipy.optimize import linear_sum_assignment as lsa
        return lsa(cost)
    except Exception:
        nq, nt = cost.shape
        if nt > nq:
            j, i = _linear_sum_assignment(cost.T)
            order = np.argsort(i)
            return i[order], j[order]
        best, best_cost = None, np.inf
        cols = np.arange(nt)
        for perm in itertools.permutations(range(nq), nt):
            c = cost[list(perm), cols].sum()
            if c < best_cost:
                best_cost, best = c, perm
        rows = np.asarray(best)
        order = np.argsort(rows)
        return rows[order], cols[order]


class HungarianMatcher:
    def __init__(self, cost_class, cost_seg, cost_giou):
        assert cost_class != 0 or cost_seg != 0 or cost_giou != 0, \
            'all costs cant be 0'
        self.cost_class = cost_class
        self.cost_seg = cost_seg
        self.cost_giou = cost_giou

    def forward(self, outputs, targets):
        bs, nq = outputs['pred_logits'].shape[:2]
        tgt_ids = jnp.concatenate([v['labels'] for v in targets])
        tgt_seg = jnp.concatenate([v['segments'] for v in targets])
        if tgt_seg.shape[0] == 0:
            return None

        c = compute_cost_matrix(outputs['pred_logits'], outputs['pred_segments'],
                                tgt_ids, tgt_seg,
                                self.cost_class, self.cost_seg, self.cost_giou)
        c = np.asarray(jax.block_until_ready(c), dtype=np.float32)  # (bs, nq, T)

        sizes = [int(v['segments'].shape[0]) for v in targets]
        indices, off = [], 0
        for i, s in enumerate(sizes):
            indices.append(_linear_sum_assignment(c[i, :, off:off + s]))
            off += s
        return [(np.asarray(i, dtype=np.int64), np.asarray(j, dtype=np.int64))
                for i, j in indices]

    __call__ = forward


# ------------------------------ reference --------------------------------- #

def _reference_cost(pred_logits, pred_segments, tgt_ids, tgt_seg, wc, ws, wg):
    bs, nq, nc = pred_logits.shape
    prob = jax.nn.softmax(pred_logits.reshape(-1, nc), axis=-1)
    out_seg = pred_segments.reshape(-1, 2)
    cost_class = -prob[:, tgt_ids]
    tgt_cl = jnp.stack([(tgt_seg[:, 0] + tgt_seg[:, 1]) * 0.5,
                        tgt_seg[:, 1] - tgt_seg[:, 0]], -1)
    cost_seg = jnp.sum(jnp.abs(out_seg[:, None, :] - tgt_cl[None, :, :]), -1)
    out_se = jnp.stack([out_seg[:, 0] - out_seg[:, 1] * 0.5,
                        out_seg[:, 0] + out_seg[:, 1] * 0.5], -1)
    left = jnp.maximum(out_se[:, None, 0], tgt_seg[None, :, 0])
    right = jnp.minimum(out_se[:, None, 1], tgt_seg[None, :, 1])
    inter = jnp.clip(right - left, 0.0)
    union = ((out_se[:, 1] - out_se[:, 0])[:, None]
             + (tgt_seg[:, 1] - tgt_seg[:, 0])[None, :] - inter)
    tiou = inter / union
    cm = ws * cost_seg + wc * cost_class - wg * tiou
    return cm.reshape(bs, nq, -1)


# --------------------------------- main ------------------------------------ #

if __name__ == "__main__":
    bs, nq, num_classes = 2, 8, 16
    sizes = [3, 4]                                  # targets per batch element
    w_class, w_seg, w_giou = 1.0, 5.0, 2.0          # deterministic cost weights

    key = jax.random.PRNGKey(0)
    k1, k2, k3, k4, k5, k6 = jax.random.split(key, 6)

    pred_logits = jax.random.normal(k1, (bs, nq, num_classes), dtype=jnp.float32)
    centers = jax.random.uniform(k2, (bs, nq), minval=0.2, maxval=0.8)
    lengths = jax.random.uniform(k3, (bs, nq), minval=0.1, maxval=0.5)
    pred_segments = jnp.stack([centers, lengths], axis=-1)          # (bs, nq, 2) (c, l)

    targets = []
    lab_keys = jax.random.split(k4, bs)
    s_keys = jax.random.split(k5, bs)
    l_keys = jax.random.split(k6, bs)
    for b, s in enumerate(sizes):
        labels = jax.random.randint(lab_keys[b], (s,), 0, num_classes)
        starts = jax.random.uniform(s_keys[b], (s,), minval=0.0, maxval=0.5)
        lens = jax.random.uniform(l_keys[b], (s,), minval=0.1, maxval=0.4)
        segs = jnp.stack([starts, starts + lens], axis=-1)           # (s, 2) (start, end)
        targets.append({'labels': labels, 'segments': segs})

    outputs = {'pred_logits': pred_logits, 'pred_segments': pred_segments}

    matcher = HungarianMatcher(cost_class=w_class, cost_seg=w_seg, cost_giou=w_giou)

    # Run the Pallas cost kernel and validate against a pure-JAX reference.
    tgt_ids = jnp.concatenate([t['labels'] for t in targets])
    tgt_seg = jnp.concatenate([t['segments'] for t in targets])
    c_kernel = jax.block_until_ready(
        compute_cost_matrix(pred_logits, pred_segments, tgt_ids, tgt_seg,
                            w_class, w_seg, w_giou))
    c_ref = jax.block_until_ready(
        _reference_cost(pred_logits, pred_segments, tgt_ids, tgt_seg,
                        w_class, w_seg, w_giou))
    # Tolerance: bf16 MXU operand for the class cost + EUP approx reciprocal
    # on the IoU union (softmax denominator now uses an exact divide).
    np.testing.assert_allclose(np.asarray(c_kernel), np.asarray(c_ref),
                               rtol=2e-2, atol=2e-2)

    indices = matcher(outputs, targets)
    assert indices is not None and len(indices) == bs
    for (i_idx, j_idx), s in zip(indices, sizes):
        assert len(i_idx) == len(j_idx) == min(nq, s)

    print("KERNEL_OK")
</pallas_src>

<mosaic_0001>
module attributes {stable_mosaic.version = 11 : i64} {
  func.func @_matcher_cost_kernel(%arg0: i32, %arg1: i32, %arg2: memref<8x128xf32, #tpu.memory_space<vmem>>, %arg3: memref<128x128xbf16, #tpu.memory_space<vmem>>, %arg4: memref<8x2xf32, #tpu.memory_space<vmem>>, %arg5: memref<2x128xf32, #tpu.memory_space<vmem>>, %arg6: memref<8x128xf32, #tpu.memory_space<vmem>>) attributes {dimension_semantics = [#tpu.dimension_semantics<parallel>, #tpu.dimension_semantics<parallel>], iteration_bounds = array<i64: 2, 1>, scalar_prefetch = 0 : i64, scratch_operands = 0 : i64, tpu.core_type = #tpu.core_type<tc>, window_params = [{transform_indices = @transform_0, window_bounds = array<i64: 8, 128>}, {transform_indices = @transform_1, window_bounds = array<i64: 128, 128>}, {transform_indices = @transform_2, window_bounds = array<i64: 8, 2>}, {transform_indices = @transform_3, window_bounds = array<i64: 2, 128>}, {transform_indices = @transform_4, window_bounds = array<i64: 8, 128>}]} {
    %c0 = arith.constant 0 : index
    %c0_0 = arith.constant 0 : index
    %0 = vector.load %arg2[%c0, %c0_0] : memref<8x128xf32, #tpu.memory_space<vmem>>, vector<8x128xf32>
    %1 = tpu.iota {dimensions = array<i32: 1>} : vector<8x128xi32>
    %c16_i32 = arith.constant 16 : i32
    %2 = vector.broadcast %c16_i32 : i32 to vector<8x128xi32>
    %3 = arith.cmpi slt, %1, %2 : vector<8x128xi32>
    %cst = arith.constant -1.000000e+30 : f32
    %4 = vector.broadcast %cst : f32 to vector<8x128xf32>
    %5 = arith.select %3, %0, %4 : vector<8x128xi1>, vector<8x128xf32>
    %cst_1 = arith.constant dense<0xFF800000> : vector<8xf32>
    %6 = vector.multi_reduction <maximumf>, %5, %cst_1 [1] : vector<8x128xf32> to vector<8xf32>
    %7 = vector.shape_cast %6 : vector<8xf32> to vector<8x1xf32>
    %8 = vector.broadcast %7 : vector<8x1xf32> to vector<8x128xf32>
    %9 = arith.subf %5, %8 : vector<8x128xf32>
    %10 = math.exp %9 : vector<8x128xf32>
    %cst_2 = arith.constant dense<0.000000e+00> : vector<8xf32>
    %11 = vector.multi_reduction <add>, %10, %cst_2 [1] : vector<8x128xf32> to vector<8xf32>
    %12 = vector.shape_cast %11 : vector<8xf32> to vector<8x1xf32>
    %13 = arith.truncf %10 : vector<8x128xf32> to vector<8x128xbf16>
    %c0_3 = arith.constant 0 : index
    %c0_4 = arith.constant 0 : index
    %14 = vector.load %arg3[%c0_3, %c0_4] : memref<128x128xbf16, #tpu.memory_space<vmem>>, vector<128x128xbf16>
    %cst_5 = arith.constant dense<0.000000e+00> : vector<8x128xf32>
    %15 = tpu.matmul %13, %14, %cst_5 {dimension_numbers = #tpu.dot_dimension_numbers<[1], [0], [0], [1], [0, 0, 1, 1], [], []>} : vector<8x128xbf16>, vector<128x128xbf16>, vector<8x128xf32> -> vector<8x128xf32>
    %cst_6 = arith.constant -1.000000e+00 : f32
    %16 = vector.broadcast %cst_6 : f32 to vector<8x1xf32>
    %17 = arith.divf %16, %12 : vector<8x1xf32>
    %18 = vector.broadcast %17 : vector<8x1xf32> to vector<8x128xf32>
    %19 = arith.mulf %15, %18 : vector<8x128xf32>
    %c0_7 = arith.constant 0 : index
    %c0_8 = arith.constant 0 : index
    %20 = vector.load %arg4[%c0_7, %c0_8] : memref<8x2xf32, #tpu.memory_space<vmem>>, vector<8x2xf32>
    %21 = vector.extract_strided_slice %20 {offsets = [0, 0], sizes = [8, 1], strides = [1, 1]} : vector<8x2xf32> to vector<8x1xf32>
    %22 = vector.extract_strided_slice %20 {offsets = [0, 1], sizes = [8, 1], strides = [1, 1]} : vector<8x2xf32> to vector<8x1xf32>
    %c0_9 = arith.constant 0 : index
    %c0_10 = arith.constant 0 : index
    %23 = vector.load %arg5[%c0_9, %c0_10] : memref<2x128xf32, #tpu.memory_space<vmem>>, vector<2x128xf32>
    %24 = vector.extract_strided_slice %23 {offsets = [0, 0], sizes = [1, 128], strides = [1, 1]} : vector<2x128xf32> to vector<1x128xf32>
    %25 = vector.extract_strided_slice %23 {offsets = [1, 0], sizes = [1, 128], strides = [1, 1]} : vector<2x128xf32> to vector<1x128xf32>
    %26 = arith.addf %24, %25 : vector<1x128xf32>
    %cst_11 = arith.constant 5.000000e-01 : f32
    %27 = vector.broadcast %cst_11 : f32 to vector<1x128xf32>
    %28 = arith.mulf %27, %26 : vector<1x128xf32>
    %29 = arith.subf %25, %24 : vector<1x128xf32>
    %cst_12 = arith.constant 5.000000e+00 : f32
    %30 = vector.broadcast %cst_12 : f32 to vector<8x1xf32>
    %31 = arith.mulf %30, %21 : vector<8x1xf32>
    %cst_13 = arith.constant 5.000000e+00 : f32
    %32 = vector.broadcast %cst_13 : f32 to vector<1x128xf32>
    %33 = arith.mulf %32, %28 : vector<1x128xf32>
    %34 = vector.broadcast %31 : vector<8x1xf32> to vector<8x128xf32>
    %35 = vector.broadcast %33 : vector<1x128xf32> to vector<8x128xf32>
    %36 = arith.subf %34, %35 : vector<8x128xf32>
    %37 = math.absf %36 : vector<8x128xf32>
    %cst_14 = arith.constant 5.000000e+00 : f32
    %38 = vector.broadcast %cst_14 : f32 to vector<8x1xf32>
    %39 = arith.mulf %38, %22 : vector<8x1xf32>
    %cst_15 = arith.constant 5.000000e+00 : f32
    %40 = vector.broadcast %cst_15 : f32 to vector<1x128xf32>
    %41 = arith.mulf %40, %29 : vector<1x128xf32>
    %42 = vector.broadcast %39 : vector<8x1xf32> to vector<8x128xf32>
    %43 = vector.broadcast %41 : vector<1x128xf32> to vector<8x128xf32>
    %44 = arith.subf %42, %43 : vector<8x128xf32>
    %45 = math.absf %44 : vector<8x128xf32>
    %46 = arith.addf %37, %45 : vector<8x128xf32>
    %47 = arith.addf %19, %46 : vector<8x128xf32>
    %cst_16 = arith.constant 5.000000e-01 : f32
    %48 = vector.broadcast %cst_16 : f32 to vector<8x1xf32>
    %49 = arith.mulf %48, %22 : vector<8x1xf32>
    %50 = arith.subf %21, %49 : vector<8x1xf32>
    %51 = arith.addf %21, %49 : vector<8x1xf32>
    %52 = vector.broadcast %50 : vector<8x1xf32> to vector<8x128xf32>
    %53 = vector.broadcast %24 : vector<1x128xf32> to vector<8x128xf32>
    %54 = arith.maximumf %52, %53 : vector<8x128xf32>
    %55 = vector.broadcast %51 : vector<8x1xf32> to vector<8x128xf32>
    %56 = vector.broadcast %25 : vector<1x128xf32> to vector<8x128xf32>
    %57 = arith.minimumf %55, %56 : vector<8x128xf32>
    %58 = arith.subf %57, %54 : vector<8x128xf32>
    %cst_17 = arith.constant 0.000000e+00 : f32
    %59 = vector.broadcast %cst_17 : f32 to vector<8x128xf32>
    %60 = arith.maximumf %58, %59 : vector<8x128xf32>
    %cst_18 = arith.constant 9.99999997E-7 : f32
    %61 = vector.broadcast %cst_18 : f32 to vector<1x128xf32>
    %62 = arith.addf %29, %61 : vector<1x128xf32>
    %63 = vector.broadcast %22 : vector<8x1xf32> to vector<8x128xf32>
    %64 = vector.broadcast %62 : vector<1x128xf32> to vector<8x128xf32>
    %65 = arith.addf %63, %64 : vector<8x128xf32>
    %66 = arith.subf %65, %60 : vector<8x128xf32>
    %67 = tpu.reciprocal %66 {approx = true} : vector<8x128xf32> -> vector<8x128xf32>
    %cst_19 = arith.constant 2.000000e+00 : f32
    %68 = vector.broadcast %cst_19 : f32 to vector<8x128xf32>
    %69 = arith.mulf %68, %67 : vector<8x128xf32>
    %70 = arith.mulf %60, %69 : vector<8x128xf32>
    %71 = arith.subf %47, %70 : vector<8x128xf32>
    %c0_20 = arith.constant 0 : index
    %c0_21 = arith.constant 0 : index
    %72 = vector.load %arg6[%c0_20, %c0_21] : memref<8x128xf32, #tpu.memory_space<vmem>>, vector<8x128xf32>
    tpu.vector_store %arg6[%c0_20, %c0_21], %71 {strides = array<i32>} : memref<8x128xf32, #tpu.memory_space<vmem>>, vector<8x128xf32>,
    return
  }
  func.func @transform_0(%arg0: i32, %arg1: i32) -> (i32, i32) {
    %c0_i32 = arith.constant 0 : i32
    %c0_i32_0 = arith.constant 0 : i32
    return %arg0, %c0_i32 : i32, i32
  }
  func.func @transform_1(%arg0: i32, %arg1: i32) -> (i32, i32) {
    %c0_i32 = arith.constant 0 : i32
    %c0_i32_0 = arith.constant 0 : i32
    return %c0_i32, %arg1 : i32, i32
  }
  func.func @transform_2(%arg0: i32, %arg1: i32) -> (i32, i32) {
    %c0_i32 = arith.constant 0 : i32
    %c0_i32_0 = arith.constant 0 : i32
    return %arg0, %c0_i32 : i32, i32
  }
  func.func @transform_3(%arg0: i32, %arg1: i32) -> (i32, i32) {
    %c0_i32 = arith.constant 0 : i32
    %c0_i32_0 = arith.constant 0 : i32
    return %c0_i32, %arg1 : i32, i32
  }
  func.func @transform_4(%arg0: i32, %arg1: i32) -> (i32, i32) {
    %c0_i32 = arith.constant 0 : i32
    return %arg0, %arg1 : i32, i32
  }
}

</mosaic_0001>

<llo_original>
// kernel: _cost_matrix_core.1
$region0: #{_cost_matrix_core.1}
  #allocation0 [shape = 'u32[]', space=smem, size = 0x4, offset = 0x4, fixed_abs, tag = 'smem constant byte address 0x4 - core index']
  #allocation1 [shape = 'u32[144,128]{1,0:T(1,128)}', space=vmem, size = 0x12000, scoped, tag = 'internal scratch']
  %s0 = inlined_call_operand.vmem [shape: f32[16,128], index: 0, kind: input, shape index: {}]
  %s1 = inlined_call_operand.vmem [shape: bf16[128,128], index: 1, kind: input, shape index: {}]
  %s2 = inlined_call_operand.vmem [shape: f32[16,2], index: 2, kind: input, shape index: {}]
  %s3 = inlined_call_operand.vmem [shape: f32[2,128], index: 3, kind: input, shape index: {}]
  %s4 = inlined_call_operand.hbm [shape: f32[16,128], index: 4, kind: output, shape index: {}]
  %s5 = sld [smem:[#allocation0]]
  $region49: #{_cost_matrix_core.1} parent=0
    _
  %s7 = ssub.s32 1, %s5
  %s8 = scalar_select 0, %s7, %s5
  $region1: #{_cost_matrix_core.1} parent=0
    #allocation2 [shape = 'u8[8192]{0}', space=vmem, size = 0x2000, scoped, tag = 'output window, operand 0']
    #allocation3 [shape = 's32[2]{0}', space=sflag, size = 0x8, scoped, tag = 'scoped memory for _cost_matrix_core.1']
    %9 = vsyncpa [#allocation3], 0
    %s10 = scalar_lea.sflag [#allocation3], 1
    %11 = vsyncpa %s10, 0
    loop: start=0, step=1, limit=4
    $region2: #{_cost_matrix_core.1} parent=1 // loop_pre_header
      _
    $region3: #{_cost_matrix_core.1} parent=1 // loop_header
      %s13 = sphi 0, %s17
      %p14 = scmp.ge.s32.totalorder %s13, 4
      %s20 = sphi 0, %s32
      %s21 = sphi 0, %s28
      %s22 = sphi 0, %s20
      %s23 = sphi 0, %s21
      %s24 = sphi 0, %s22
      %s25 = sphi 0, %s23
      %s35 = sphi 0, %s37
      %s38 = sphi 0, %s35
      %s39 = sphi 0, %s38
      %s55 = sphi 0, %s39
      %s61 = sphi 0, %s63
      %s64 = sphi 0, %s61
      %s65 = sphi 0, %s64
      %s81 = sphi 0, %s65
      %s87 = sphi 0, %s89
      %s90 = sphi 0, %s87
      %s91 = sphi 0, %s90
      %s107 = sphi 0, %s91
      %s113 = sphi 0, %s115
      %s116 = sphi 0, %s113
      %s117 = sphi 0, %s116
      %s133 = sphi 0, %s117
      %s141 = sphi 0, %s143
      %s144 = sphi 0, %s141
      %s145 = sphi 0, %s144
      %s161 = sphi 0, %s145
    $region4: #{_cost_matrix_core.1} parent=1 // loop_header_branch
      %16 = sbr.rel (%p14) target = $region8
    $region5: #{_cost_matrix_core.1} parent=1 // loop_body
      %s18 = ssub.s32 %s13, 1
      %s19 = ssub.s32 %s13, 2
      %s26 = sadd.s32 1, %s21
      %p27 = scmp.ge.s32.totalorder %s26, 1
      %s28 = scalar_select %p27, 0, %s26
      %s29 = sadd.s32 1, %s20
      %s30 = scalar_select %p27, %s29, %s20
      %p31 = scmp.ge.s32.totalorder %s30, 2
      %s32 = scalar_select %p31, 0, %s30
      %s33 = ssub.s32 %s20, %s32
      %p34 = scmp.eq.s32.totalorder %s33, 0
      %s36 = sadd.s32 %s35, 1
      %s37 = scalar_select %p34, %s35, %s36
      %p40 = pneg %p34
      %p41 = scmp.eq.s32.totalorder %s13, 1
      %p42 = por %p40, %p41
      %p43 = scmp.ne.s32.totalorder %s35, %s38
      %p44 = scmp.eq.s32.totalorder %s13, 0
      %p45 = por %p43, %p44
      %p46 = scmp.ne.s32.totalorder %s35, %s38
      %p47 = scmp.eq.s32.totalorder %s18, 1
      %p48 = por %p46, %p47
      %p49 = scmp.ne.s32.totalorder %s38, %s39
      %p50 = scmp.eq.s32.totalorder %s18, 0
      %p51 = por %p49, %p50
      %p52 = scmp.ne.s32.totalorder %s38, %s39
      %p53 = scmp.eq.s32.totalorder %s19, 1
      %p54 = por %p52, %p53
      %p56 = scmp.ne.s32.totalorder %s39, %s55
      %p57 = scmp.eq.s32.totalorder %s19, 0
      %p58 = por %p56, %p57
      %s59 = ssub.s32 %s21, %s28
      %p60 = scmp.eq.s32.totalorder %s59, 0
      %s62 = sadd.s32 %s61, 1
      %s63 = scalar_select %p60, %s61, %s62
      %p66 = pneg %p60
      %p67 = scmp.eq.s32.totalorder %s13, 1
      %p68 = por %p66, %p67
      %p69 = scmp.ne.s32.totalorder %s61, %s64
      %p70 = scmp.eq.s32.totalorder %s13, 0
      %p71 = por %p69, %p70
      %p72 = scmp.ne.s32.totalorder %s61, %s64
      %p73 = scmp.eq.s32.totalorder %s18, 1
      %p74 = por %p72, %p73
      %p75 = scmp.ne.s32.totalorder %s64, %s65
      %p76 = scmp.eq.s32.totalorder %s18, 0
      %p77 = por %p75, %p76
      %p78 = scmp.ne.s32.totalorder %s64, %s65
      %p79 = scmp.eq.s32.totalorder %s19, 1
      %p80 = por %p78, %p79
      %p82 = scmp.ne.s32.totalorder %s65, %s81
      %p83 = scmp.eq.s32.totalorder %s19, 0
      %p84 = por %p82, %p83
      %s85 = ssub.s32 %s20, %s32
      %p86 = scmp.eq.s32.totalorder %s85, 0
      %s88 = sadd.s32 %s87, 1
      %s89 = scalar_select %p86, %s87, %s88
      %p92 = pneg %p86
      %p93 = scmp.eq.s32.totalorder %s13, 1
      %p94 = por %p92, %p93
      %p95 = scmp.ne.s32.totalorder %s87, %s90
      %p96 = scmp.eq.s32.totalorder %s13, 0
      %p97 = por %p95, %p96
      %p98 = scmp.ne.s32.totalorder %s87, %s90
      %p99 = scmp.eq.s32.totalorder %s18, 1
      %p100 = por %p98, %p99
      %p101 = scmp.ne.s32.totalorder %s90, %s91
      %p102 = scmp.eq.s32.totalorder %s18, 0
      %p103 = por %p101, %p102
      %p104 = scmp.ne.s32.totalorder %s90, %s91
      %p105 = scmp.eq.s32.totalorder %s19, 1
      %p106 = por %p104, %p105
      %p108 = scmp.ne.s32.totalorder %s91, %s107
      %p109 = scmp.eq.s32.totalorder %s19, 0
      %p110 = por %p108, %p109
      %s111 = ssub.s32 %s21, %s28
      %p112 = scmp.eq.s32.totalorder %s111, 0
      %s114 = sadd.s32 %s113, 1
      %s115 = scalar_select %p112, %s113, %s114
      %p118 = pneg %p112
      %p119 = scmp.eq.s32.totalorder %s13, 1
      %p120 = por %p118, %p119
      %p121 = scmp.ne.s32.totalorder %s113, %s116
      %p122 = scmp.eq.s32.totalorder %s13, 0
      %p123 = por %p121, %p122
      %p124 = scmp.ne.s32.totalorder %s113, %s116
      %p125 = scmp.eq.s32.totalorder %s18, 1
      %p126 = por %p124, %p125
      %p127 = scmp.ne.s32.totalorder %s116, %s117
      %p128 = scmp.eq.s32.totalorder %s18, 0
      %p129 = por %p127, %p128
      %p130 = scmp.ne.s32.totalorder %s116, %s117
      %p131 = scmp.eq.s32.totalorder %s19, 1
      %p132 = por %p130, %p131
      %p134 = scmp.ne.s32.totalorder %s117, %s133
      %p135 = scmp.eq.s32.totalorder %s19, 0
      %p136 = por %p134, %p135
      %s137 = ssub.s32 %s20, %s32
      %s138 = ssub.s32 %s21, %s28
      %s139 = sor.u32 %s137, %s138
      %p140 = scmp.eq.s32.totalorder %s139, 0
      %s142 = sadd.s32 %s141, 1
      %s143 = scalar_select %p140, %s141, %s142
      %p146 = pneg %p140
      %p147 = scmp.eq.s32.totalorder %s13, 1
      %p148 = por %p146, %p147
      %p149 = scmp.ne.s32.totalorder %s141, %s144
      %p150 = scmp.eq.s32.totalorder %s13, 0
      %p151 = por %p149, %p150
      %p152 = scmp.ne.s32.totalorder %s141, %s144
      %p153 = scmp.eq.s32.totalorder %s18, 1
      %p154 = por %p152, %p153
      %p155 = scmp.ne.s32.totalorder %s144, %s145
      %p156 = scmp.eq.s32.totalorder %s18, 0
      %p157 = por %p155, %p156
      %p158 = scmp.ne.s32.totalorder %s144, %s145
      %p159 = scmp.eq.s32.totalorder %s19, 1
      %p160 = por %p158, %p159
      %p162 = scmp.ne.s32.totalorder %s145, %s161
      %p163 = scmp.eq.s32.totalorder %s19, 0
      %p164 = por %p162, %p163
      %p165 = scmp.le.s32.totalorder 1, %s13
      %p166 = scmp.lt.s32.totalorder %s13, 3
      %p167 = pnand %p165, %p166
      %p168 = pneg %p167
      // Predicated region
      $region9: #{_cost_matrix_core.1} parent=5 // pred_check
        _
      $region10: #{_cost_matrix_core.1} parent=5 // pred_check_branch
        %170 = sbr.rel (%p167) target = $region12
      $region11: #{_cost_matrix_core.1} parent=5 // pred_region
        %s171 = ssub.s32 %s13, 1
        // Predicated region
        $region13: #{_cost_matrix_core.1} parent=11 // pred_check
          %p172 = pneg %p77
        $region14: #{_cost_matrix_core.1} parent=11 // pred_check_branch
          %174 = sbr.rel (%p172) target = $region16
        $region15: #{_cost_matrix_core.1} parent=11 // pred_region
          %p175 = scmp.lt.s32.totalorder %s23, 0
          %s176 = scalar_select %p175, %s23, 0
          %s177 = smul.addr %s176, 4
          %s178 = scalar_lea.vmem %s1, %s177
        $region16: #{_cost_matrix_core.1} parent=11 // pred_fallthru
          _
        // Predicated region
        $region17: #{_cost_matrix_core.1} parent=11 // pred_check
          %p179 = pneg %p129
        $region18: #{_cost_matrix_core.1} parent=11 // pred_check_branch
          %181 = sbr.rel (%p179) target = $region20
        $region19: #{_cost_matrix_core.1} parent=11 // pred_region
          %p182 = scmp.lt.s32.totalorder %s23, 0
          %s183 = scalar_select %p182, %s23, 0
          %s184 = smul.addr %s183, 2
          %s185 = scalar_lea.vmem %s3, %s184
        $region20: #{_cost_matrix_core.1} parent=11 // pred_fallthru
          _
      $region12: #{_cost_matrix_core.1} parent=5 // pred_fallthru
        _
      %p186 = scmp.lt.s32.totalorder %s13, 2
      // Predicated region
      $region21: #{_cost_matrix_core.1} parent=5 // pred_check
        %p187 = pneg %p186
      $region22: #{_cost_matrix_core.1} parent=5 // pred_check_branch
        %189 = sbr.rel (%p187) target = $region24
      $region23: #{_cost_matrix_core.1} parent=5 // pred_region
        // Predicated region
        $region25: #{_cost_matrix_core.1} parent=23 // pred_check
          %p190 = pneg %p45
        $region26: #{_cost_matrix_core.1} parent=23 // pred_check_branch
          %192 = sbr.rel (%p190) target = $region28
        $region27: #{_cost_matrix_core.1} parent=23 // pred_region
          %p193 = scmp.lt.s32.totalorder %s20, 1
          %s194 = scalar_select %p193, %s20, 1
          %s195 = smul.addr %s194, 8
          %s196 = scalar_lea.vmem %s0, %s195
        $region28: #{_cost_matrix_core.1} parent=23 // pred_fallthru
          _
        // Predicated region
        $region29: #{_cost_matrix_core.1} parent=23 // pred_check
          %p197 = pneg %p97
        $region30: #{_cost_matrix_core.1} parent=23 // pred_check_branch
          %199 = sbr.rel (%p197) target = $region32
        $region31: #{_cost_matrix_core.1} parent=23 // pred_region
          %p200 = scmp.lt.s32.totalorder %s20, 1
          %s201 = scalar_select %p200, %s20, 1
          %s202 = smul.addr %s201, 8
          %s203 = scalar_lea.vmem %s2, %s202
        $region32: #{_cost_matrix_core.1} parent=23 // pred_fallthru
          _
      $region24: #{_cost_matrix_core.1} parent=5 // pred_fallthru
        _
      %p204 = scmp.le.s32.totalorder 1, %s13
      %p205 = scmp.lt.s32.totalorder %s13, 3
      %p206 = pnand %p204, %p205
      %p207 = pneg %p206
      // Predicated region
      $region33: #{_cost_matrix_core.1} parent=5 // pred_check
        _
      $region34: #{_cost_matrix_core.1} parent=5 // pred_check_branch
        %209 = sbr.rel (%p206) target = $region36
      $region35: #{_cost_matrix_core.1} parent=5 // pred_region
        %s210 = ssub.s32 %s13, 1
        %p211 = scmp.lt.s32.totalorder %s22, 1
        %s212 = scalar_select %p211, %s22, 1
        %s213 = smul.addr %s212, 8
        %s214 = scalar_lea.vmem %s0, %s213
        %p215 = pneg %p51
        %p216 = pneg %p48
        %p217 = scmp.lt.s32.totalorder %s23, 0
        %s218 = scalar_select %p217, %s23, 0
        %s219 = smul.addr %s218, 4
        %s220 = scalar_lea.vmem %s1, %s219
        %p221 = pneg %p77
        %p222 = pneg %p74
        %p223 = scmp.lt.s32.totalorder %s22, 1
        %s224 = scalar_select %p223, %s22, 1
        %s225 = smul.addr %s224, 8
        %s226 = scalar_lea.vmem %s2, %s225
        %p227 = pneg %p103
        %p228 = pneg %p100
        %p229 = scmp.lt.s32.totalorder %s23, 0
        %s230 = scalar_select %p229, %s23, 0
        %s231 = smul.addr %s230, 2
        %s232 = scalar_lea.vmem %s3, %s231
        %p233 = pneg %p129
        %p234 = pneg %p126
        %p235 = pneg %p157
        %p236 = pneg %p154
        %s237 = sand.u32 %s144, 1
        %s238 = scalar_lea.sflag [#allocation3], %s237
        %s239 = sand.u32 %s144, 1
        %s240 = smul.addr %s239, 8
        %s241 = scalar_lea.vmem [#allocation2], %s240
        %p242 = scmp.lt.s32.totalorder %s22, 1
        %s243 = scalar_select %p242, %s22, 1
        %s244 = smul.addr %s243, 8
        %s245 = scalar_lea.vmem %s0, %s244
        %p246 = scmp.lt.s32.totalorder %s23, 0
        %s247 = scalar_select %p246, %s23, 0
        %s248 = smul.addr %s247, 4
        %s249 = scalar_lea.vmem %s1, %s248
        %p250 = scmp.lt.s32.totalorder %s22, 1
        %s251 = scalar_select %p250, %s22, 1
        %s252 = smul.addr %s251, 8
        %s253 = scalar_lea.vmem %s2, %s252
        %p254 = scmp.lt.s32.totalorder %s23, 0
        %s255 = scalar_select %p254, %s23, 0
        %s256 = smul.addr %s255, 2
        %s257 = scalar_lea.vmem %s3, %s256
        %v259 = vld [vmem:[%s245] sm:$0xff]
        %v260 = vlaneseq
        %v261 = vand.u32 %v260, 127
        %vm262 = vcmp.lt.s32.totalorder %v261, 16
        %v263 = vsel %vm262, %v259, -1e+30
        %264 = vmax.xlane.f32.xlu0 %v263
        %v265 = vpop.xlane.xlu0 %264
        %v266 = vsub.f32 %v263, %v265
        %v267 = vmul.f32 %v266, 1.442695
        %v268 = vpow.pop %v267
        %269 = vadd.xlane.f32.xlu0 %v268
        %v270 = vpop.xlane.xlu0 %269
        %v271 = vpack.c.bf16 %v268, %v268
        %v272 = vld [vmem:[%s249] sm:$0xf]
        %v273 = vld [vmem:[%s249 + $0x4] sm:$0xf]
        %v274 = vld [vmem:[%s249 + $0x8] sm:$0xf]
        %v275 = vld [vmem:[%s249 + $0xc] sm:$0xf]
        %v276 = vld [vmem:[%s249 + $0x10] sm:$0xf]
        %v277 = vld [vmem:[%s249 + $0x14] sm:$0xf]
        %v278 = vld [vmem:[%s249 + $0x18] sm:$0xf]
        %v279 = vld [vmem:[%s249 + $0x1c] sm:$0xf]
        %v280 = vld [vmem:[%s249 + $0x20] sm:$0xf]
        %v281 = vld [vmem:[%s249 + $0x24] sm:$0xf]
        %v282 = vld [vmem:[%s249 + $0x28] sm:$0xf]
        %v283 = vld [vmem:[%s249 + $0x2c] sm:$0xf]
        %v284 = vld [vmem:[%s249 + $0x30] sm:$0xf]
        %v285 = vld [vmem:[%s249 + $0x34] sm:$0xf]
        %v286 = vld [vmem:[%s249 + $0x38] sm:$0xf]
        %v287 = vld [vmem:[%s249 + $0x3c] sm:$0xf]
        %v304 = vunpack.c.l.b16 %v272
        %v305 = vunpack.c.l.b16 %v273
        %v306 = vunpack.c.l.b16 %v274
        %v307 = vunpack.c.l.b16 %v275
        %v308 = vunpack.c.l.b16 %v276
        %v309 = vunpack.c.l.b16 %v277
        %v310 = vunpack.c.l.b16 %v278
        %v311 = vunpack.c.l.b16 %v279
        %v312 = vunpack.c.l.b16 %v280
        %v313 = vunpack.c.l.b16 %v281
        %v314 = vunpack.c.l.b16 %v282
        %v315 = vunpack.c.l.b16 %v283
        %v316 = vunpack.c.l.b16 %v284
        %v317 = vunpack.c.l.b16 %v285
        %v318 = vunpack.c.l.b16 %v286
        %v319 = vunpack.c.l.b16 %v287
        %v320 = vpack.c.b16 %v305, %v304
        %v321 = vpack.c.b16 %v307, %v306
        %v322 = vpack.c.b16 %v309, %v308
        %v323 = vpack.c.b16 %v311, %v310
        %v324 = vpack.c.b16 %v313, %v312
        %v325 = vpack.c.b16 %v315, %v314
        %v326 = vpack.c.b16 %v317, %v316
        %v327 = vpack.c.b16 %v319, %v318
        %336 = vmatprep.subr.bf16.mxu0 0
        %337 = vmatpush1.bf16.msra.mxu0 %v327
        %338 = vmatprep.subr.bf16.mxu0 0
        %339 = vmatpush1.bf16.msra.mxu0 %v326
        %340 = vmatprep.subr.bf16.mxu0 0
        %341 = vmatpush1.bf16.msra.mxu0 %v325
        %342 = vmatprep.subr.bf16.mxu0 0
        %343 = vmatpush1.bf16.msra.mxu0 %v324
        %344 = vmatprep.subr.bf16.mxu0 0
        %345 = vmatpush1.bf16.msra.mxu0 %v323
        %346 = vmatprep.subr.bf16.mxu0 0
        %347 = vmatpush1.bf16.msra.mxu0 %v322
        %348 = vmatprep.subr.bf16.mxu0 0
        %349 = vmatpush1.bf16.msra.mxu0 %v321
        %350 = vmatprep.subr.bf16.mxu0 0
        %351 = vmatpush1.bf16.msra.mxu0 %v320
        %352 = vmatprep.subr.bf16.mxu0 0
        %353 = vmatpush2.bf16.msra.mxu0 0
        %354 = vmatprep.subr.bf16.mxu0 0
        %355 = vmatpush2.bf16.msra.mxu0 0
        %356 = vmatprep.subr.bf16.mxu0 0
        %357 = vmatpush2.bf16.msra.mxu0 0
        %358 = vmatprep.subr.bf16.mxu0 0
        %359 = vmatpush2.bf16.msra.mxu0 0
        %360 = vmatprep.subr.bf16.mxu0 0
        %361 = vmatpush2.bf16.msra.mxu0 0
        %362 = vmatprep.subr.bf16.mxu0 0
        %363 = vmatpush2.bf16.msra.mxu0 0
        %364 = vmatprep.subr.bf16.mxu0 0
        %365 = vmatpush2.bf16.msra.mxu0 0
        %366 = vmatprep.subr.bf16.mxu0 0
        %367 = vmatpush2.bf16.msra.mxu0 0
        %368 = vmatprep.mubr.bf16.mxu0 0
        %369 = vmatmul.mubr.bf16.gmra.mxu0 %v271
        %v370 = vpop.f32.mrf.mxu0
        %v371 = vadd.f32 0.0, %v370
        %v372 = vpop.f32.mrf.mxu0
        %v373 = vpop.f32.mrf.mxu0
        %v374 = vpop.f32.mrf.mxu0
        %375 = vdwg.mxu0
        %v376 = vrcp.pop %v270
        %v377 = vmul.f32 -1.0, %v376
        %v378 = vmul.f32 %v371, %v377
        %v379 = vld [vmem:[%s253] sm:$0xff]
        %v380 = vld [vmem:[%s257] sm:$0x3]
        %v382 = vrot.slane %v380, 1
        %v384 = vadd.f32 %v380, %v382
        %v385 = vmul.f32 %v384, 0.5
        %v386 = vrot.slane %v380, 7
        %v388 = vsub.f32 %v380, %v386
        %v389 = vmul.f32 %v379, 5.0
        %v390 = vmul.f32 %v385, 5.0
        %392 = vset.pattern.permute.xlu0 0
        %393 = vperm.xlu0 %392, %v389
        %v394 = vpop.permute.xlu0 %393
        %v396 = vlaneseq
        %v397 = vshrl.u32 %v396, 7
        %v398 = vsub.s32 0, %v397
        %v399 = vrot.slane %v390, %v398
        %v400 = vsub.f32 %v394, %v399
        %v401 = vand.u32 2147483647, %v400
        %v402 = vmul.f32 %v388, 5.0
        %403 = vset.pattern.permute.xlu0 1
        %404 = vperm.xlu0 %403, %v389
        %v405 = vpop.permute.xlu0 %404
        %v407 = vlaneseq
        %v408 = vshrl.u32 %v407, 7
        %v409 = vsub.s32 1, %v408
        %v410 = vrot.slane %v402, %v409
        %v411 = vsub.f32 %v405, %v410
        %v412 = vand.u32 2147483647, %v411
        %v413 = vadd.f32 %v401, %v412
        %v414 = vadd.f32 %v378, %v413
        %v415 = vmul.f32 %v379, 0.5
        %417 = vrot.lane.b32.xlu0 %v415, 127
        %v418 = vpop.permute.xlu0 %417
        %v420 = vsub.f32 %v379, %v418
        %v421 = vadd.f32 %v379, %v418
        %423 = vset.pattern.permute.xlu0 0
        %424 = vperm.xlu0 %423, %v420
        %v425 = vpop.permute.xlu0 %424
        %v427 = vlaneseq
        %v428 = vshrl.u32 %v427, 7
        %v429 = vsub.s32 0, %v428
        %v430 = vrot.slane %v380, %v429
        %v431 = vmax.f32 %v425, %v430
        %433 = vset.pattern.permute.xlu0 0
        %434 = vperm.xlu0 %433, %v421
        %v435 = vpop.permute.xlu0 %434
        %v437 = vlaneseq
        %v438 = vshrl.u32 %v437, 7
        %v439 = vsub.s32 1, %v438
        %v440 = vrot.slane %v380, %v439
        %v441 = vmin.f32 %v435, %v440
        %v442 = vsub.f32 %v441, %v431
        %v443 = vmax.f32 %v442, 0.0
        %v444 = vadd.f32 %v388, 1e-06
        %446 = vset.pattern.permute.xlu0 1
        %447 = vperm.xlu0 %446, %v379
        %v448 = vpop.permute.xlu0 %447
        %v450 = vlaneseq
        %v451 = vshrl.u32 %v450, 7
        %v452 = vsub.s32 1, %v451
        %v453 = vrot.slane %v444, %v452
        %v454 = vadd.f32 %v448, %v453
        %v455 = vsub.f32 %v454, %v443
        %v456 = vrcp.pop %v455
        %v457 = vmul.f32 %v456, 2.0
        %v458 = vmul.f32 %v443, %v457
        %v459 = vsub.f32 %v414, %v458
        %460 = vst [vmem:[%s241] sm:$0xff] %v459
        %s461 = sand.u32 %s144, 1
        %s462 = scalar_lea.sflag [#allocation3], %s461
        %s463 = sand.u32 %s144, 1
        %s464 = smul.addr %s463, 8
        %s465 = scalar_lea.vmem [#allocation2], %s464
        // Predicated region
        $region37: #{_cost_matrix_core.1} parent=35 // pred_check
          %p466 = pneg %p154
        $region38: #{_cost_matrix_core.1} parent=35 // pred_check_branch
          %468 = sbr.rel (%p466) target = $region40
        $region39: #{_cost_matrix_core.1} parent=35 // pred_region
          %s470 = ssub.s32 128, 128
          %471 = vsyncadd %s462, %s470
          %s472 = sadd.s32 %s23, %s22
          %s473 = smul.addr %s472, 128
          %s474 = scalar_lea.hbm %s4, %s473
          %s476 = sshll.u32 %s465, 4
          %s477 = int_to_ptr.vmem [resolvable:$true] %s476
          %479 = dma.vmem_to_hbm [thread:$0]  %s477, 128, %s474, %s462
        $region40: #{_cost_matrix_core.1} parent=35 // pred_fallthru
          _
      $region36: #{_cost_matrix_core.1} parent=5 // pred_fallthru
        _
      %p480 = scmp.le.s32.totalorder 2, %s13
      // Predicated region
      $region41: #{_cost_matrix_core.1} parent=5 // pred_check
        %p481 = pneg %p480
      $region42: #{_cost_matrix_core.1} parent=5 // pred_check_branch
        %483 = sbr.rel (%p481) target = $region44
      $region43: #{_cost_matrix_core.1} parent=5 // pred_region
        %s484 = ssub.s32 %s13, 2
        // Predicated region
        $region45: #{_cost_matrix_core.1} parent=43 // pred_check
          %p485 = pneg %p160
        $region46: #{_cost_matrix_core.1} parent=43 // pred_check_branch
          %487 = sbr.rel (%p485) target = $region48
        $region47: #{_cost_matrix_core.1} parent=43 // pred_region
          %s488 = sand.u32 %s145, 1
          %s489 = scalar_lea.sflag [#allocation3], %s488
          %s490 = sand.u32 %s145, 1
          %s491 = smul.addr %s490, 8
          %s492 = scalar_lea.vmem [#allocation2], %s491
          %493 = dma.done %s489, 128
        $region48: #{_cost_matrix_core.1} parent=43 // pred_fallthru
          _
      $region44: #{_cost_matrix_core.1} parent=5 // pred_fallthru
        _
    $region6: #{_cost_matrix_core.1} parent=1 // loop_footer
      %s17 = sadd.s32 1, %s13
    $region7: #{_cost_matrix_core.1} parent=1 // loop_footer_branch
      %12 = sbr.rel target = $region3
    $region8: #{_cost_matrix_core.1} parent=1 // loop_exit
      _
    %494 = vsyncpa [#allocation3], 1
    %s495 = scalar_lea.sflag [#allocation3], 1
    %496 = vsyncpa %s495, 1

</llo_original>
